<compile_context>
chip_gen: v5e
topology: v5e:2x2
jax: 0.10.0
libtpu: 0.0.40
codegen_flags: <defaults>
</compile_context>

<pallas_src>
import functools

import jax
import jax.numpy as jnp
from jax.experimental import pallas as pl
from jax.experimental.pallas import tpu as pltpu

BS = 4  # block_size (module asserts == 4)


# --------------------------------------------------------------------------
# Kernel
# --------------------------------------------------------------------------
def _s2d_kernel(sel_ref, x_ref, o_ref):
    # sel_ref: (W, BS*Wc)         one-hot, sel[w, bw*Wc + q] = [w == 4q + bw]
    # x_ref  : (Nb, C, THc, BS*W) lane index j = bh*W + w  <->  x[.., 4p+bh, w]
    # o_ref  : (Nb, 16*C, THc, Wc)
    nb, c, thc, bsw = x_ref.shape
    w = bsw // BS
    wc = w // BS
    sel = sel_ref[...]

    for bh in range(BS):
        # Rows 4p+bh of the image == static contiguous lane chunk of the block.
        x_bh = x_ref[:, :, :, bh * w:(bh + 1) * w]            # (Nb, C, THc, W)
        x2d = x_bh.reshape(nb * c * thc, w)
        # One fused one-hot matmul per bh (exact selection in x.dtype).
        y = jnp.dot(x2d, sel, preferred_element_type=x2d.dtype)  # (M, BS*Wc)
        for bw in range(BS):
            blk = y[:, bw * wc:(bw + 1) * wc].reshape(nb, c, thc, wc)
            lo = (bh * BS + bw) * c
            o_ref[:, lo:lo + c, :, :] = blk.astype(o_ref.dtype)


# --------------------------------------------------------------------------
# Tiling / VMEM accounting (padded footprint)
# --------------------------------------------------------------------------
def _round_up(v, m):
    return (v + m - 1) // m * m


def _padded_bytes(shape, itemsize, sublane):
    *lead, s, l = shape
    n = 1
    for d in lead:
        n *= d
    return n * _round_up(s, sublane) * _round_up(l, 128) * itemsize


def _footprint(nb, thc, C, W, Wc, itemsize, sublane):
    inp = _padded_bytes((nb, C, thc, BS * W), itemsize, sublane)
    out = _padded_bytes((nb, C * BS * BS, thc, Wc), itemsize, sublane)
    sel = _padded_bytes((W, BS * Wc), itemsize, sublane)
    # in/out blocks are double-buffered by the pipeline; the selector has a
    # constant index_map (fetched once) but still owns 2 buffers -> count both.
    return 2 * (inp + out) + 2 * sel


def _divisors(n):
    return [d for d in range(1, n + 1) if n % d == 0]


def _pick_tiling(N, C, Hc, W, Wc, itemsize, sublane, budget):
    # H-tile candidates: multiples of the sublane quantum, or the full Hc.
    h_cands = sorted(d for d in _divisors(Hc) if d % sublane == 0 or d == Hc)
    if not h_cands:
        h_cands = _divisors(Hc)

    # Largest H tile (Nb = 1) that fits the budget; never exceed it unless
    # even the smallest candidate is over (then vmem_limit is sized to it).
    thc = h_cands[0]
    for d in h_cands:
        if _footprint(1, d, C, W, Wc, itemsize, sublane) <= budget:
            thc = d

    # Largest image batch (cap 8) that still fits.
    nb = 1
    for d in _divisors(N):
        if d <= 8 and _footprint(d, thc, C, W, Wc, itemsize, sublane) <= budget:
            nb = d

    # v7x: make sure both TensorCores get work (>= 2 grid steps) if possible.
    if (N // nb) * (Hc // thc) < 2:
        h_small = [d for d in h_cands if Hc // d >= 2]
        if h_small:
            thc = max(h_small)
        elif nb > 1:
            nb_small = [d for d in _divisors(N) if N // d >= 2]
            if nb_small:
                nb = max(d for d in nb_small if d <= nb)
    return nb, thc


# --------------------------------------------------------------------------
# Wrapper
# --------------------------------------------------------------------------
@functools.partial(jax.jit, static_argnames=("block_budget_bytes",))
def space_to_depth(x, block_budget_bytes=8 * 1024 * 1024):
    """Pallas implementation of SpaceToDepthModule.forward (block_size=4).

    Accepts (N, C, H, W) or (N, B, C, H, W); the 5-D (jit) form merges the
    leading dims, exactly like SpaceToDepthJit.
    """
    if x.ndim == 5:
        n, b = x.shape[:2]
        x = x.reshape((n * b,) + x.shape[2:])
    N, C, H, W = x.shape
    assert H % BS == 0 and W % BS == 0
    if x.dtype not in (jnp.float32, jnp.bfloat16):
        # TODO(synk): fp16 / fp8 / int inputs need a non-MXU selection path.
        raise NotImplementedError("space_to_depth: only float32/bfloat16")

    Hc, Wc = H // BS, W // BS
    itemsize = x.dtype.itemsize
    sublane = 8 if itemsize >= 4 else 16

    nb, thc = _pick_tiling(N, C, Hc, W, Wc, itemsize, sublane,
                           block_budget_bytes)
    need = _footprint(nb, thc, C, W, Wc, itemsize, sublane)
    vmem_limit = int(max(16 * 1024 * 1024, need + 4 * 1024 * 1024))

    # Column-selection one-hots, bw-major columns: sel[w, bw*Wc+q] = [w==4q+bw].
    col = jnp.arange(BS * Wc, dtype=jnp.int32)
    src = BS * (col % Wc) + col // Wc
    sel = (jnp.arange(W, dtype=jnp.int32)[:, None] == src[None, :]).astype(x.dtype)

    # Free reshape: the 4 bh sub-rows of each output row become contiguous
    # lane chunks -> bh selection is a static slice inside the kernel.
    x_r = x.reshape(N, C, Hc, BS * W)

    flops = 2 * N * C * H * W * W                      # 4 (M,W)x(W,W) per step
    bytes_accessed = 2 * N * C * H * W * itemsize + sel.size * itemsize

    return pl.pallas_call(
        _s2d_kernel,
        out_shape=jax.ShapeDtypeStruct((N, C * BS * BS, Hc, Wc), x.dtype),
        grid=(N // nb, Hc // thc),
        in_specs=[
            pl.BlockSpec((W, BS * Wc), lambda n, t: (0, 0)),      # resident sel
            pl.BlockSpec((nb, C, thc, BS * W), lambda n, t: (n, 0, t, 0)),
        ],
        out_specs=pl.BlockSpec((nb, C * BS * BS, thc, Wc),
                               lambda n, t: (n, 0, t, 0)),
        compiler_params=pltpu.CompilerParams(
            dimension_semantics=("parallel", "parallel"),
            vmem_limit_bytes=vmem_limit),
        cost_estimate=pl.CostEstimate(flops=flops, transcendentals=0,
                                      bytes_accessed=bytes_accessed),
    )(sel, x_r)


# --------------------------------------------------------------------------
# Pure-JAX reference (mirrors the PyTorch view/permute/view)
# --------------------------------------------------------------------------
def space_to_depth_reference(x):
    if x.ndim == 5:
        n, b = x.shape[:2]
        x = x.reshape((n * b,) + x.shape[2:])
    N, C, H, W = x.shape
    y = x.reshape(N, C, H // BS, BS, W // BS, BS)
    y = jnp.transpose(y, (0, 3, 5, 1, 2, 4))
    return y.reshape(N, C * BS * BS, H // BS, W // BS)


if __name__ == "__main__":
    key = jax.random.PRNGKey(0)
    k1, k2, k3 = jax.random.split(key, 3)

    # (N, C, H, W) -- SpaceToDepth path
    x1 = jax.random.normal(k1, (2, 4, 16, 16), dtype=jnp.float32)
    o1 = jax.block_until_ready(space_to_depth(x1))
    assert o1.shape == (2, 64, 4, 4) and o1.dtype == x1.dtype
    assert jnp.array_equal(o1, space_to_depth_reference(x1)), "mismatch (4-D)"

    # (N, B, C, H, W) -- SpaceToDepthJit path (leading dims merged)
    x2 = jax.random.normal(k2, (1, 2, 3, 16, 16), dtype=jnp.float32)
    o2 = jax.block_until_ready(space_to_depth(x2))
    assert o2.shape == (2, 48, 4, 4) and o2.dtype == x2.dtype
    assert jnp.array_equal(o2, space_to_depth_reference(x2)), "mismatch (5-D)"

    # Taller input with a tight budget to exercise the H-tiling grid axis.
    x3 = jax.random.normal(k3, (1, 2, 64, 16), dtype=jnp.float32)
    o3 = jax.block_until_ready(space_to_depth(x3, block_budget_bytes=512 * 1024))
    assert o3.shape == (1, 32, 16, 4)
    assert jnp.array_equal(o3, space_to_depth_reference(x3)), "mismatch (tiled)"

    print("KERNEL_OK")
</pallas_src>

<mosaic_0001>
module attributes {stable_mosaic.version = 11 : i64} {
  func.func @_s2d_kernel(%arg0: i32, %arg1: i32, %arg2: memref<16x16xf32, #tpu.memory_space<vmem>>, %arg3: memref<1x4x4x64xf32, #tpu.memory_space<vmem>>, %arg4: memref<1x64x4x4xf32, #tpu.memory_space<vmem>>) attributes {dimension_semantics = [#tpu.dimension_semantics<parallel>, #tpu.dimension_semantics<parallel>], iteration_bounds = array<i64: 2, 1>, scalar_prefetch = 0 : i64, scratch_operands = 0 : i64, tpu.core_type = #tpu.core_type<tc>, window_params = [{pipeline_mode = #tpu.pipeline_mode<synchronous>, transform_indices = @transform_0, window_bounds = array<i64: 16, 16>}, {transform_indices = @transform_1, window_bounds = array<i64: 1, 4, 4, 64>}, {transform_indices = @transform_2, window_bounds = array<i64: 1, 64, 4, 4>}]} {
    %c0 = arith.constant 0 : index
    %c0_0 = arith.constant 0 : index
    %0 = vector.load %arg2[%c0, %c0_0] : memref<16x16xf32, #tpu.memory_space<vmem>>, vector<16x16xf32>
    %c0_1 = arith.constant 0 : index
    %c0_2 = arith.constant 0 : index
    %c0_3 = arith.constant 0 : index
    %c0_4 = arith.constant 0 : index
    %1 = vector.load %arg3[%c0_1, %c0_2, %c0_3, %c0_4] : memref<1x4x4x64xf32, #tpu.memory_space<vmem>>, vector<1x4x4x16xf32>
    %2 = vector.shape_cast %1 : vector<1x4x4x16xf32> to vector<16x16xf32>
    %cst = arith.constant dense<0.000000e+00> : vector<16x16xf32>
    %3 = tpu.matmul %2, %0, %cst {dimension_numbers = #tpu.dot_dimension_numbers<[1], [0], [0], [1], [0, 0, 1, 1], [], []>} : vector<16x16xf32>, vector<16x16xf32>, vector<16x16xf32> -> vector<16x16xf32>
    %4 = vector.extract_strided_slice %3 {offsets = [0, 0], sizes = [16, 4], strides = [1, 1]} : vector<16x16xf32> to vector<16x4xf32>
    %5 = vector.shape_cast %4 : vector<16x4xf32> to vector<1x4x4x4xf32>
    %c0_5 = arith.constant 0 : index
    %c0_6 = arith.constant 0 : index
    %c0_7 = arith.constant 0 : index
    %c0_8 = arith.constant 0 : index
    %6 = vector.load %arg4[%c0_5, %c0_6, %c0_7, %c0_8] : memref<1x64x4x4xf32, #tpu.memory_space<vmem>>, vector<1x4x4x4xf32>
    tpu.vector_store %arg4[%c0_5, %c0_6, %c0_7, %c0_8], %5 {strides = array<i32>} : memref<1x64x4x4xf32, #tpu.memory_space<vmem>>, vector<1x4x4x4xf32>,
    %7 = vector.extract_strided_slice %3 {offsets = [0, 4], sizes = [16, 4], strides = [1, 1]} : vector<16x16xf32> to vector<16x4xf32>
    %8 = vector.shape_cast %7 : vector<16x4xf32> to vector<1x4x4x4xf32>
    %c0_9 = arith.constant 0 : index
    %c4 = arith.constant 4 : index
    %c0_10 = arith.constant 0 : index
    %c0_11 = arith.constant 0 : index
    %9 = vector.load %arg4[%c0_9, %c4, %c0_10, %c0_11] : memref<1x64x4x4xf32, #tpu.memory_space<vmem>>, vector<1x4x4x4xf32>
    tpu.vector_store %arg4[%c0_9, %c4, %c0_10, %c0_11], %8 {strides = array<i32>} : memref<1x64x4x4xf32, #tpu.memory_space<vmem>>, vector<1x4x4x4xf32>,
    %10 = vector.extract_strided_slice %3 {offsets = [0, 8], sizes = [16, 4], strides = [1, 1]} : vector<16x16xf32> to vector<16x4xf32>
    %11 = vector.shape_cast %10 : vector<16x4xf32> to vector<1x4x4x4xf32>
    %c0_12 = arith.constant 0 : index
    %c8 = arith.constant 8 : index
    %c0_13 = arith.constant 0 : index
    %c0_14 = arith.constant 0 : index
    %12 = vector.load %arg4[%c0_12, %c8, %c0_13, %c0_14] : memref<1x64x4x4xf32, #tpu.memory_space<vmem>>, vector<1x4x4x4xf32>
    tpu.vector_store %arg4[%c0_12, %c8, %c0_13, %c0_14], %11 {strides = array<i32>} : memref<1x64x4x4xf32, #tpu.memory_space<vmem>>, vector<1x4x4x4xf32>,
    %13 = vector.extract_strided_slice %3 {offsets = [0, 12], sizes = [16, 4], strides = [1, 1]} : vector<16x16xf32> to vector<16x4xf32>
    %14 = vector.shape_cast %13 : vector<16x4xf32> to vector<1x4x4x4xf32>
    %c0_15 = arith.constant 0 : index
    %c12 = arith.constant 12 : index
    %c0_16 = arith.constant 0 : index
    %c0_17 = arith.constant 0 : index
    %15 = vector.load %arg4[%c0_15, %c12, %c0_16, %c0_17] : memref<1x64x4x4xf32, #tpu.memory_space<vmem>>, vector<1x4x4x4xf32>
    tpu.vector_store %arg4[%c0_15, %c12, %c0_16, %c0_17], %14 {strides = array<i32>} : memref<1x64x4x4xf32, #tpu.memory_space<vmem>>, vector<1x4x4x4xf32>,
    %c0_18 = arith.constant 0 : index
    %c0_19 = arith.constant 0 : index
    %c0_20 = arith.constant 0 : index
    %c16 = arith.constant 16 : index
    %16 = vector.load %arg3[%c0_18, %c0_19, %c0_20, %c16] : memref<1x4x4x64xf32, #tpu.memory_space<vmem>>, vector<1x4x4x16xf32>
    %17 = vector.shape_cast %16 : vector<1x4x4x16xf32> to vector<16x16xf32>
    %cst_21 = arith.constant dense<0.000000e+00> : vector<16x16xf32>
    %18 = tpu.matmul %17, %0, %cst_21 {dimension_numbers = #tpu.dot_dimension_numbers<[1], [0], [0], [1], [0, 0, 1, 1], [], []>} : vector<16x16xf32>, vector<16x16xf32>, vector<16x16xf32> -> vector<16x16xf32>
    %19 = vector.extract_strided_slice %18 {offsets = [0, 0], sizes = [16, 4], strides = [1, 1]} : vector<16x16xf32> to vector<16x4xf32>
    %20 = vector.shape_cast %19 : vector<16x4xf32> to vector<1x4x4x4xf32>
    %c0_22 = arith.constant 0 : index
    %c16_23 = arith.constant 16 : index
    %c0_24 = arith.constant 0 : index
    %c0_25 = arith.constant 0 : index
    %21 = vector.load %arg4[%c0_22, %c16_23, %c0_24, %c0_25] : memref<1x64x4x4xf32, #tpu.memory_space<vmem>>, vector<1x4x4x4xf32>
    tpu.vector_store %arg4[%c0_22, %c16_23, %c0_24, %c0_25], %20 {strides = array<i32>} : memref<1x64x4x4xf32, #tpu.memory_space<vmem>>, vector<1x4x4x4xf32>,
    %22 = vector.extract_strided_slice %18 {offsets = [0, 4], sizes = [16, 4], strides = [1, 1]} : vector<16x16xf32> to vector<16x4xf32>
    %23 = vector.shape_cast %22 : vector<16x4xf32> to vector<1x4x4x4xf32>
    %c0_26 = arith.constant 0 : index
    %c20 = arith.constant 20 : index
    %c0_27 = arith.constant 0 : index
    %c0_28 = arith.constant 0 : index
    %24 = vector.load %arg4[%c0_26, %c20, %c0_27, %c0_28] : memref<1x64x4x4xf32, #tpu.memory_space<vmem>>, vector<1x4x4x4xf32>
    tpu.vector_store %arg4[%c0_26, %c20, %c0_27, %c0_28], %23 {strides = array<i32>} : memref<1x64x4x4xf32, #tpu.memory_space<vmem>>, vector<1x4x4x4xf32>,
    %25 = vector.extract_strided_slice %18 {offsets = [0, 8], sizes = [16, 4], strides = [1, 1]} : vector<16x16xf32> to vector<16x4xf32>
    %26 = vector.shape_cast %25 : vector<16x4xf32> to vector<1x4x4x4xf32>
    %c0_29 = arith.constant 0 : index
    %c24 = arith.constant 24 : index
    %c0_30 = arith.constant 0 : index
    %c0_31 = arith.constant 0 : index
    %27 = vector.load %arg4[%c0_29, %c24, %c0_30, %c0_31] : memref<1x64x4x4xf32, #tpu.memory_space<vmem>>, vector<1x4x4x4xf32>
    tpu.vector_store %arg4[%c0_29, %c24, %c0_30, %c0_31], %26 {strides = array<i32>} : memref<1x64x4x4xf32, #tpu.memory_space<vmem>>, vector<1x4x4x4xf32>,
    %28 = vector.extract_strided_slice %18 {offsets = [0, 12], sizes = [16, 4], strides = [1, 1]} : vector<16x16xf32> to vector<16x4xf32>
    %29 = vector.shape_cast %28 : vector<16x4xf32> to vector<1x4x4x4xf32>
    %c0_32 = arith.constant 0 : index
    %c28 = arith.constant 28 : index
    %c0_33 = arith.constant 0 : index
    %c0_34 = arith.constant 0 : index
    %30 = vector.load %arg4[%c0_32, %c28, %c0_33, %c0_34] : memref<1x64x4x4xf32, #tpu.memory_space<vmem>>, vector<1x4x4x4xf32>
    tpu.vector_store %arg4[%c0_32, %c28, %c0_33, %c0_34], %29 {strides = array<i32>} : memref<1x64x4x4xf32, #tpu.memory_space<vmem>>, vector<1x4x4x4xf32>,
    %c0_35 = arith.constant 0 : index
    %c0_36 = arith.constant 0 : index
    %c0_37 = arith.constant 0 : index
    %c32 = arith.constant 32 : index
    %31 = vector.load %arg3[%c0_35, %c0_36, %c0_37, %c32] : memref<1x4x4x64xf32, #tpu.memory_space<vmem>>, vector<1x4x4x16xf32>
    %32 = vector.shape_cast %31 : vector<1x4x4x16xf32> to vector<16x16xf32>
    %cst_38 = arith.constant dense<0.000000e+00> : vector<16x16xf32>
    %33 = tpu.matmul %32, %0, %cst_38 {dimension_numbers = #tpu.dot_dimension_numbers<[1], [0], [0], [1], [0, 0, 1, 1], [], []>} : vector<16x16xf32>, vector<16x16xf32>, vector<16x16xf32> -> vector<16x16xf32>
    %34 = vector.extract_strided_slice %33 {offsets = [0, 0], sizes = [16, 4], strides = [1, 1]} : vector<16x16xf32> to vector<16x4xf32>
    %35 = vector.shape_cast %34 : vector<16x4xf32> to vector<1x4x4x4xf32>
    %c0_39 = arith.constant 0 : index
    %c32_40 = arith.constant 32 : index
    %c0_41 = arith.constant 0 : index
    %c0_42 = arith.constant 0 : index
    %36 = vector.load %arg4[%c0_39, %c32_40, %c0_41, %c0_42] : memref<1x64x4x4xf32, #tpu.memory_space<vmem>>, vector<1x4x4x4xf32>
    tpu.vector_store %arg4[%c0_39, %c32_40, %c0_41, %c0_42], %35 {strides = array<i32>} : memref<1x64x4x4xf32, #tpu.memory_space<vmem>>, vector<1x4x4x4xf32>,
    %37 = vector.extract_strided_slice %33 {offsets = [0, 4], sizes = [16, 4], strides = [1, 1]} : vector<16x16xf32> to vector<16x4xf32>
    %38 = vector.shape_cast %37 : vector<16x4xf32> to vector<1x4x4x4xf32>
    %c0_43 = arith.constant 0 : index
    %c36 = arith.constant 36 : index
    %c0_44 = arith.constant 0 : index
    %c0_45 = arith.constant 0 : index
    %39 = vector.load %arg4[%c0_43, %c36, %c0_44, %c0_45] : memref<1x64x4x4xf32, #tpu.memory_space<vmem>>, vector<1x4x4x4xf32>
    tpu.vector_store %arg4[%c0_43, %c36, %c0_44, %c0_45], %38 {strides = array<i32>} : memref<1x64x4x4xf32, #tpu.memory_space<vmem>>, vector<1x4x4x4xf32>,
    %40 = vector.extract_strided_slice %33 {offsets = [0, 8], sizes = [16, 4], strides = [1, 1]} : vector<16x16xf32> to vector<16x4xf32>
    %41 = vector.shape_cast %40 : vector<16x4xf32> to vector<1x4x4x4xf32>
    %c0_46 = arith.constant 0 : index
    %c40 = arith.constant 40 : index
    %c0_47 = arith.constant 0 : index
    %c0_48 = arith.constant 0 : index
    %42 = vector.load %arg4[%c0_46, %c40, %c0_47, %c0_48] : memref<1x64x4x4xf32, #tpu.memory_space<vmem>>, vector<1x4x4x4xf32>
    tpu.vector_store %arg4[%c0_46, %c40, %c0_47, %c0_48], %41 {strides = array<i32>} : memref<1x64x4x4xf32, #tpu.memory_space<vmem>>, vector<1x4x4x4xf32>,
    %43 = vector.extract_strided_slice %33 {offsets = [0, 12], sizes = [16, 4], strides = [1, 1]} : vector<16x16xf32> to vector<16x4xf32>
    %44 = vector.shape_cast %43 : vector<16x4xf32> to vector<1x4x4x4xf32>
    %c0_49 = arith.constant 0 : index
    %c44 = arith.constant 44 : index
    %c0_50 = arith.constant 0 : index
    %c0_51 = arith.constant 0 : index
    %45 = vector.load %arg4[%c0_49, %c44, %c0_50, %c0_51] : memref<1x64x4x4xf32, #tpu.memory_space<vmem>>, vector<1x4x4x4xf32>
    tpu.vector_store %arg4[%c0_49, %c44, %c0_50, %c0_51], %44 {strides = array<i32>} : memref<1x64x4x4xf32, #tpu.memory_space<vmem>>, vector<1x4x4x4xf32>,
    %c0_52 = arith.constant 0 : index
    %c0_53 = arith.constant 0 : index
    %c0_54 = arith.constant 0 : index
    %c48 = arith.constant 48 : index
    %46 = vector.load %arg3[%c0_52, %c0_53, %c0_54, %c48] : memref<1x4x4x64xf32, #tpu.memory_space<vmem>>, vector<1x4x4x16xf32>
    %47 = vector.shape_cast %46 : vector<1x4x4x16xf32> to vector<16x16xf32>
    %cst_55 = arith.constant dense<0.000000e+00> : vector<16x16xf32>
    %48 = tpu.matmul %47, %0, %cst_55 {dimension_numbers = #tpu.dot_dimension_numbers<[1], [0], [0], [1], [0, 0, 1, 1], [], []>} : vector<16x16xf32>, vector<16x16xf32>, vector<16x16xf32> -> vector<16x16xf32>
    %49 = vector.extract_strided_slice %48 {offsets = [0, 0], sizes = [16, 4], strides = [1, 1]} : vector<16x16xf32> to vector<16x4xf32>
    %50 = vector.shape_cast %49 : vector<16x4xf32> to vector<1x4x4x4xf32>
    %c0_56 = arith.constant 0 : index
    %c48_57 = arith.constant 48 : index
    %c0_58 = arith.constant 0 : index
    %c0_59 = arith.constant 0 : index
    %51 = vector.load %arg4[%c0_56, %c48_57, %c0_58, %c0_59] : memref<1x64x4x4xf32, #tpu.memory_space<vmem>>, vector<1x4x4x4xf32>
    tpu.vector_store %arg4[%c0_56, %c48_57, %c0_58, %c0_59], %50 {strides = array<i32>} : memref<1x64x4x4xf32, #tpu.memory_space<vmem>>, vector<1x4x4x4xf32>,
    %52 = vector.extract_strided_slice %48 {offsets = [0, 4], sizes = [16, 4], strides = [1, 1]} : vector<16x16xf32> to vector<16x4xf32>
    %53 = vector.shape_cast %52 : vector<16x4xf32> to vector<1x4x4x4xf32>
    %c0_60 = arith.constant 0 : index
    %c52 = arith.constant 52 : index
    %c0_61 = arith.constant 0 : index
    %c0_62 = arith.constant 0 : index
    %54 = vector.load %arg4[%c0_60, %c52, %c0_61, %c0_62] : memref<1x64x4x4xf32, #tpu.memory_space<vmem>>, vector<1x4x4x4xf32>
    tpu.vector_store %arg4[%c0_60, %c52, %c0_61, %c0_62], %53 {strides = array<i32>} : memref<1x64x4x4xf32, #tpu.memory_space<vmem>>, vector<1x4x4x4xf32>,
    %55 = vector.extract_strided_slice %48 {offsets = [0, 8], sizes = [16, 4], strides = [1, 1]} : vector<16x16xf32> to vector<16x4xf32>
    %56 = vector.shape_cast %55 : vector<16x4xf32> to vector<1x4x4x4xf32>
    %c0_63 = arith.constant 0 : index
    %c56 = arith.constant 56 : index
    %c0_64 = arith.constant 0 : index
    %c0_65 = arith.constant 0 : index
    %57 = vector.load %arg4[%c0_63, %c56, %c0_64, %c0_65] : memref<1x64x4x4xf32, #tpu.memory_space<vmem>>, vector<1x4x4x4xf32>
    tpu.vector_store %arg4[%c0_63, %c56, %c0_64, %c0_65], %56 {strides = array<i32>} : memref<1x64x4x4xf32, #tpu.memory_space<vmem>>, vector<1x4x4x4xf32>,
    %58 = vector.extract_strided_slice %48 {offsets = [0, 12], sizes = [16, 4], strides = [1, 1]} : vector<16x16xf32> to vector<16x4xf32>
    %59 = vector.shape_cast %58 : vector<16x4xf32> to vector<1x4x4x4xf32>
    %c0_66 = arith.constant 0 : index
    %c60 = arith.constant 60 : index
    %c0_67 = arith.constant 0 : index
    %c0_68 = arith.constant 0 : index
    %60 = vector.load %arg4[%c0_66, %c60, %c0_67, %c0_68] : memref<1x64x4x4xf32, #tpu.memory_space<vmem>>, vector<1x4x4x4xf32>
    tpu.vector_store %arg4[%c0_66, %c60, %c0_67, %c0_68], %59 {strides = array<i32>} : memref<1x64x4x4xf32, #tpu.memory_space<vmem>>, vector<1x4x4x4xf32>,
    return
  }
  func.func @transform_0(%arg0: i32, %arg1: i32) -> (i32, i32) {
    %c0_i32 = arith.constant 0 : i32
    %c0_i32_0 = arith.constant 0 : i32
    %c0_i32_1 = arith.constant 0 : i32
    return %c0_i32, %c0_i32_0 : i32, i32
  }
  func.func @transform_1(%arg0: i32, %arg1: i32) -> (i32, i32, i32, i32) {
    %c0_i32 = arith.constant 0 : i32
    %c0_i32_0 = arith.constant 0 : i32
    %c0_i32_1 = arith.constant 0 : i32
    return %arg0, %c0_i32, %arg1, %c0_i32_0 : i32, i32, i32, i32
  }
  func.func @transform_2(%arg0: i32, %arg1: i32) -> (i32, i32, i32, i32) {
    %c0_i32 = arith.constant 0 : i32
    %c0_i32_0 = arith.constant 0 : i32
    %c0_i32_1 = arith.constant 0 : i32
    return %arg0, %c0_i32, %arg1, %c0_i32_0 : i32, i32, i32, i32
  }
}

</mosaic_0001>

<llo_original>
// kernel: space_to_depth.1
$region0: #{space_to_depth.1}
  #allocation0 [shape = 'u32[]', space=smem, size = 0x4, offset = 0x4, fixed_abs, tag = 'smem constant byte address 0x4 - core index']
  #allocation1 [shape = 'u32[72,128]{1,0:T(1,128)}', space=vmem, size = 0x9000, scoped, tag = 'internal scratch']
  %s0 = inlined_call_operand.vmem [shape: f32[16,16], index: 0, kind: input, shape index: {}]
  %s1 = inlined_call_operand.vmem [shape: f32[2,4,4,64], index: 1, kind: input, shape index: {}]
  %s2 = inlined_call_operand.vmem [shape: f32[2,64,4,4], index: 2, kind: output, shape index: {}]
  %s3 = sld [smem:[#allocation0]]
  $region41: #{space_to_depth.1} parent=0
    _
  %s5 = ssub.s32 1, %s3
  %s6 = scalar_select 0, %s5, %s3
  loop: start=0, step=1, limit=4
  $region2: #{space_to_depth.1} parent=0 // loop_pre_header
    _
  $region3: #{space_to_depth.1} parent=0 // loop_header
    %s8 = sphi 0, %s12
    %p9 = scmp.ge.s32.totalorder %s8, 4
    %s15 = sphi 0, %s27
    %s16 = sphi 0, %s23
    %s17 = sphi 0, %s15
    %s18 = sphi 0, %s16
    %s19 = sphi 0, %s17
    %s20 = sphi 0, %s18
    %s28 = sphi 0, %s28
    %s30 = sphi 0, %s28
    %s31 = sphi 0, %s30
    %s45 = sphi 0, %s31
    %s53 = sphi 0, %s55
    %s56 = sphi 0, %s53
    %s57 = sphi 0, %s56
    %s73 = sphi 0, %s57
    %s81 = sphi 0, %s83
    %s84 = sphi 0, %s81
    %s85 = sphi 0, %s84
    %s101 = sphi 0, %s85
  $region4: #{space_to_depth.1} parent=0 // loop_header_branch
    %11 = sbr.rel (%p9) target = $region8
  $region5: #{space_to_depth.1} parent=0 // loop_body
    %s13 = ssub.s32 %s8, 1
    %s14 = ssub.s32 %s8, 2
    %s21 = sadd.s32 1, %s16
    %p22 = scmp.ge.s32.totalorder %s21, 1
    %s23 = scalar_select %p22, 0, %s21
    %s24 = sadd.s32 1, %s15
    %s25 = scalar_select %p22, %s24, %s15
    %p26 = scmp.ge.s32.totalorder %s25, 2
    %s27 = scalar_select %p26, 0, %s25
    %s29 = sadd.s32 %s28, 1
    %p32 = scmp.eq.s32.totalorder %s8, 1
    %p33 = scmp.ne.s32.totalorder %s28, %s30
    %p34 = scmp.eq.s32.totalorder %s8, 0
    %p35 = por %p33, %p34
    %p36 = scmp.ne.s32.totalorder %s28, %s30
    %p37 = scmp.eq.s32.totalorder %s13, 1
    %p38 = por %p36, %p37
    %p39 = scmp.ne.s32.totalorder %s30, %s31
    %p40 = scmp.eq.s32.totalorder %s13, 0
    %p41 = por %p39, %p40
    %p42 = scmp.ne.s32.totalorder %s30, %s31
    %p43 = scmp.eq.s32.totalorder %s14, 1
    %p44 = por %p42, %p43
    %p46 = scmp.ne.s32.totalorder %s31, %s45
    %p47 = scmp.eq.s32.totalorder %s14, 0
    %p48 = por %p46, %p47
    %s49 = ssub.s32 %s15, %s27
    %s50 = ssub.s32 %s16, %s23
    %s51 = sor.u32 %s49, %s50
    %p52 = scmp.eq.s32.totalorder %s51, 0
    %s54 = sadd.s32 %s53, 1
    %s55 = scalar_select %p52, %s53, %s54
    %p58 = pneg %p52
    %p59 = scmp.eq.s32.totalorder %s8, 1
    %p60 = por %p58, %p59
    %p61 = scmp.ne.s32.totalorder %s53, %s56
    %p62 = scmp.eq.s32.totalorder %s8, 0
    %p63 = por %p61, %p62
    %p64 = scmp.ne.s32.totalorder %s53, %s56
    %p65 = scmp.eq.s32.totalorder %s13, 1
    %p66 = por %p64, %p65
    %p67 = scmp.ne.s32.totalorder %s56, %s57
    %p68 = scmp.eq.s32.totalorder %s13, 0
    %p69 = por %p67, %p68
    %p70 = scmp.ne.s32.totalorder %s56, %s57
    %p71 = scmp.eq.s32.totalorder %s14, 1
    %p72 = por %p70, %p71
    %p74 = scmp.ne.s32.totalorder %s57, %s73
    %p75 = scmp.eq.s32.totalorder %s14, 0
    %p76 = por %p74, %p75
    %s77 = ssub.s32 %s15, %s27
    %s78 = ssub.s32 %s16, %s23
    %s79 = sor.u32 %s77, %s78
    %p80 = scmp.eq.s32.totalorder %s79, 0
    %s82 = sadd.s32 %s81, 1
    %s83 = scalar_select %p80, %s81, %s82
    %p86 = pneg %p80
    %p87 = scmp.eq.s32.totalorder %s8, 1
    %p88 = por %p86, %p87
    %p89 = scmp.ne.s32.totalorder %s81, %s84
    %p90 = scmp.eq.s32.totalorder %s8, 0
    %p91 = por %p89, %p90
    %p92 = scmp.ne.s32.totalorder %s81, %s84
    %p93 = scmp.eq.s32.totalorder %s13, 1
    %p94 = por %p92, %p93
    %p95 = scmp.ne.s32.totalorder %s84, %s85
    %p96 = scmp.eq.s32.totalorder %s13, 0
    %p97 = por %p95, %p96
    %p98 = scmp.ne.s32.totalorder %s84, %s85
    %p99 = scmp.eq.s32.totalorder %s14, 1
    %p100 = por %p98, %p99
    %p102 = scmp.ne.s32.totalorder %s85, %s101
    %p103 = scmp.eq.s32.totalorder %s14, 0
    %p104 = por %p102, %p103
    %p105 = scmp.le.s32.totalorder 1, %s8
    %p106 = scmp.lt.s32.totalorder %s8, 3
    %p107 = pnand %p105, %p106
    %p108 = pneg %p107
    // Predicated region
    $region9: #{space_to_depth.1} parent=5 // pred_check
      _
    $region10: #{space_to_depth.1} parent=5 // pred_check_branch
      %110 = sbr.rel (%p107) target = $region12
    $region11: #{space_to_depth.1} parent=5 // pred_region
      %s111 = ssub.s32 %s8, 1
      // Predicated region
      $region13: #{space_to_depth.1} parent=11 // pred_check
        %p112 = pneg %p41
      $region14: #{space_to_depth.1} parent=11 // pred_check_branch
        %114 = sbr.rel (%p112) target = $region16
      $region15: #{space_to_depth.1} parent=11 // pred_region
        _
      $region16: #{space_to_depth.1} parent=11 // pred_fallthru
        _
    $region12: #{space_to_depth.1} parent=5 // pred_fallthru
      _
    %p115 = scmp.lt.s32.totalorder %s8, 2
    // Predicated region
    $region17: #{space_to_depth.1} parent=5 // pred_check
      %p116 = pneg %p115
    $region18: #{space_to_depth.1} parent=5 // pred_check_branch
      %118 = sbr.rel (%p116) target = $region20
    $region19: #{space_to_depth.1} parent=5 // pred_region
      // Predicated region
      $region21: #{space_to_depth.1} parent=19 // pred_check
        %p119 = pneg %p63
      $region22: #{space_to_depth.1} parent=19 // pred_check_branch
        %121 = sbr.rel (%p119) target = $region24
      $region23: #{space_to_depth.1} parent=19 // pred_region
        %p122 = scmp.lt.s32.totalorder %s15, 1
        %s123 = scalar_select %p122, %s15, 1
        %p124 = scmp.lt.s32.totalorder %s16, 0
        %s125 = scalar_select %p124, %s16, 0
        %s126 = smul.addr %s123, 4
        %s127 = sadd.s32 %s125, %s126
        %s128 = smul.addr %s127, 4
        %s129 = scalar_lea.vmem %s1, %s128
      $region24: #{space_to_depth.1} parent=19 // pred_fallthru
        _
    $region20: #{space_to_depth.1} parent=5 // pred_fallthru
      _
    %p130 = scmp.le.s32.totalorder 1, %s8
    %p131 = scmp.lt.s32.totalorder %s8, 3
    %p132 = pnand %p130, %p131
    %p133 = pneg %p132
    // Predicated region
    $region25: #{space_to_depth.1} parent=5 // pred_check
      _
    $region26: #{space_to_depth.1} parent=5 // pred_check_branch
      %135 = sbr.rel (%p132) target = $region28
    $region27: #{space_to_depth.1} parent=5 // pred_region
      %s136 = ssub.s32 %s8, 1
      %p137 = pneg %p41
      %p138 = pneg %p38
      %p139 = scmp.lt.s32.totalorder %s17, 1
      %s140 = scalar_select %p139, %s17, 1
      %p141 = scmp.lt.s32.totalorder %s18, 0
      %s142 = scalar_select %p141, %s18, 0
      %s143 = smul.addr %s140, 4
      %s144 = sadd.s32 %s142, %s143
      %s145 = smul.addr %s144, 4
      %s146 = scalar_lea.vmem %s1, %s145
      %p147 = pneg %p69
      %p148 = pneg %p66
      %p149 = pneg %p97
      %p150 = pneg %p94
      %p151 = scmp.lt.s32.totalorder %s17, 1
      %s152 = scalar_select %p151, %s17, 1
      %p153 = scmp.lt.s32.totalorder %s18, 0
      %s154 = scalar_select %p153, %s18, 0
      %s155 = smul.addr %s152, 64
      %s156 = sadd.s32 %s154, %s155
      %s157 = smul.addr %s156, 4
      %s158 = scalar_lea.vmem %s2, %s157
      %p159 = scmp.lt.s32.totalorder %s17, 1
      %s160 = scalar_select %p159, %s17, 1
      %p161 = scmp.lt.s32.totalorder %s18, 0
      %s162 = scalar_select %p161, %s18, 0
      %s163 = smul.addr %s160, 4
      %s164 = sadd.s32 %s162, %s163
      %s165 = smul.addr %s164, 4
      %s166 = scalar_lea.vmem %s1, %s165
      %p167 = scmp.lt.s32.totalorder %s17, 1
      %s168 = scalar_select %p167, %s17, 1
      %p169 = scmp.lt.s32.totalorder %s18, 0
      %s170 = scalar_select %p169, %s18, 0
      %s171 = smul.addr %s168, 64
      %s172 = sadd.s32 %s170, %s171
      %s173 = smul.addr %s172, 4
      %s174 = scalar_lea.vmem %s2, %s173
      %v175 = vld [vmem:[%s0] sm:$0xff]
      %v176 = vld [vmem:[%s0 + $0x8] sm:$0xff]
      %v177 = vld [vmem:[%s166] sm:$0xf]
      %v178 = vld [vmem:[%s166 + $0x4] sm:$0xf]
      %v179 = vld [vmem:[%s166 + $0x8] sm:$0xf]
      %v180 = vld [vmem:[%s166 + $0xc] sm:$0xf]
      %185 = vst [vmem:[#allocation1] ss:$2 sm:$0xff] %v177
      %s186 = scalar_lea.vmem [#allocation1], 1
      %187 = vst [vmem:[%s186] ss:$2 sm:$0xff] %v178
      %s188 = scalar_lea.vmem [#allocation1], 16
      %189 = vst [vmem:[%s188] ss:$2 sm:$0xff] %v179
      %s190 = scalar_lea.vmem [#allocation1], 17
      %191 = vst [vmem:[%s190] ss:$2 sm:$0xff] %v180
      %v192 = vld.sshfl [vmem:[#allocation1] sm:$0xff pattern:$0x75316420]
      %v193 = vld.sshfl [vmem:[#allocation1 + $0x10] sm:$0xff pattern:$0x75316420]
      %vm194 = vcmask 130048
      %v195 = vsel %vm194, %v192, 0
      %v197 = vsel %vm194, %v193, 0
      %199 = vmatpush.msra.mxu0 0.0
      %200 = vmatpush.msra.mxu0 0.0
      %201 = vmatpush.msra.mxu0 0.0
      %202 = vmatpush.msra.mxu0 0.0
      %203 = vmatpush.msra.mxu0 0.0
      %204 = vmatpush.msra.mxu0 0.0
      %205 = vmatpush.msra.mxu0 0.0
      %206 = vmatpush.msra.mxu0 0.0
      %207 = vmatpush.msra.mxu0 0.0
      %208 = vmatpush.msra.mxu0 0.0
      %209 = vmatpush.msra.mxu0 0.0
      %210 = vmatpush.msra.mxu0 0.0
      %211 = vmatpush.msra.mxu0 0.0
      %212 = vmatpush.msra.mxu0 0.0
      %213 = vmatpush.msra.mxu0 %v176
      %214 = vmatpush.msra.mxu0 %v175
      %215 = vmatmul.f32.gmra.mxu0 %v195
      %v216 = vpop.f32.mrf.mxu0
      %v217 = vadd.f32 0.0, %v216
      %218 = vmatmul.f32.gmra.mxu0 %v197
      %v219 = vpop.f32.mrf.mxu0
      %v220 = vadd.f32 0.0, %v219
      %221 = vdwg.mxu0
      %v224 = vrot.slane %v217, 4
      %v225 = vrot.slane %v220, 4
      %vm228 = vcmask 27648
      %229 = vst.msk [vmem:[%s174] sm:$0xf] %vm228, %v217
      %230 = vst.msk [vmem:[%s174 + $0x4] sm:$0xf] %vm228, %v224
      %231 = vst.msk [vmem:[%s174 + $0x8] sm:$0xf] %vm228, %v220
      %232 = vst.msk [vmem:[%s174 + $0xc] sm:$0xf] %vm228, %v225
      %233 = vst [vmem:[#allocation1] ss:$2 sm:$0xff] %v217
      %v234 = vld.sshfl [vmem:[#allocation1] sm:$0xff pattern:$0x75316420]
      %s235 = scalar_lea.vmem [#allocation1], 16
      %236 = vst [vmem:[%s235] ss:$2 sm:$0xff] %v224
      %v237 = vld.sshfl [vmem:[#allocation1 + $0x10] sm:$0xff pattern:$0x75316420]
      %s238 = scalar_lea.vmem [#allocation1], 32
      %239 = vst [vmem:[%s238] ss:$2 sm:$0xff] %v220
      %v240 = vld.sshfl [vmem:[#allocation1 + $0x20] sm:$0xff pattern:$0x75316420]
      %s241 = scalar_lea.vmem [#allocation1], 48
      %242 = vst [vmem:[%s241] ss:$2 sm:$0xff] %v225
      %v243 = vld.sshfl [vmem:[#allocation1 + $0x30] sm:$0xff pattern:$0x75316420]
      %244 = vrot.lane.b32.xlu0 %v234, 124
      %v245 = vpop.permute.xlu0 %244
      %246 = vrot.lane.b32.xlu0 %v237, 124
      %v247 = vpop.permute.xlu0 %246
      %248 = vrot.lane.b32.xlu0 %v240, 124
      %v249 = vpop.permute.xlu0 %248
      %250 = vrot.lane.b32.xlu0 %v243, 124
      %v251 = vpop.permute.xlu0 %250
      %s256 = scalar_lea.vmem %s174, 16
      %257 = vst.msk [vmem:[%s256] sm:$0xf] %vm228, %v245
      %258 = vst.msk [vmem:[%s256 + $0x4] sm:$0xf] %vm228, %v247
      %259 = vst.msk [vmem:[%s256 + $0x8] sm:$0xf] %vm228, %v249
      %260 = vst.msk [vmem:[%s256 + $0xc] sm:$0xf] %vm228, %v251
      %261 = vst [vmem:[#allocation1] ss:$2 sm:$0xff] %v217
      %v262 = vld.sshfl [vmem:[#allocation1] sm:$0xff pattern:$0x75316420]
      %s263 = scalar_lea.vmem [#allocation1], 16
      %264 = vst [vmem:[%s263] ss:$2 sm:$0xff] %v224
      %v265 = vld.sshfl [vmem:[#allocation1 + $0x10] sm:$0xff pattern:$0x75316420]
      %s266 = scalar_lea.vmem [#allocation1], 32
      %267 = vst [vmem:[%s266] ss:$2 sm:$0xff] %v220
      %v268 = vld.sshfl [vmem:[#allocation1 + $0x20] sm:$0xff pattern:$0x75316420]
      %s269 = scalar_lea.vmem [#allocation1], 48
      %270 = vst [vmem:[%s269] ss:$2 sm:$0xff] %v225
      %v271 = vld.sshfl [vmem:[#allocation1 + $0x30] sm:$0xff pattern:$0x75316420]
      %272 = vrot.lane.b32.xlu0 %v262, 120
      %v273 = vpop.permute.xlu0 %272
      %274 = vrot.lane.b32.xlu0 %v265, 120
      %v275 = vpop.permute.xlu0 %274
      %276 = vrot.lane.b32.xlu0 %v268, 120
      %v277 = vpop.permute.xlu0 %276
      %278 = vrot.lane.b32.xlu0 %v271, 120
      %v279 = vpop.permute.xlu0 %278
      %s284 = scalar_lea.vmem %s174, 32
      %285 = vst.msk [vmem:[%s284] sm:$0xf] %vm228, %v273
      %286 = vst.msk [vmem:[%s284 + $0x4] sm:$0xf] %vm228, %v275
      %287 = vst.msk [vmem:[%s284 + $0x8] sm:$0xf] %vm228, %v277
      %288 = vst.msk [vmem:[%s284 + $0xc] sm:$0xf] %vm228, %v279
      %289 = vst [vmem:[#allocation1] ss:$2 sm:$0xff] %v217
      %v290 = vld.sshfl [vmem:[#allocation1] sm:$0xff pattern:$0x75316420]
      %s291 = scalar_lea.vmem [#allocation1], 16
      %292 = vst [vmem:[%s291] ss:$2 sm:$0xff] %v224
      %v293 = vld.sshfl [vmem:[#allocation1 + $0x10] sm:$0xff pattern:$0x75316420]
      %s294 = scalar_lea.vmem [#allocation1], 32
      %295 = vst [vmem:[%s294] ss:$2 sm:$0xff] %v220
      %v296 = vld.sshfl [vmem:[#allocation1 + $0x20] sm:$0xff pattern:$0x75316420]
      %s297 = scalar_lea.vmem [#allocation1], 48
      %298 = vst [vmem:[%s297] ss:$2 sm:$0xff] %v225
      %v299 = vld.sshfl [vmem:[#allocation1 + $0x30] sm:$0xff pattern:$0x75316420]
      %300 = vrot.lane.b32.xlu0 %v290, 116
      %v301 = vpop.permute.xlu0 %300
      %302 = vrot.lane.b32.xlu0 %v293, 116
      %v303 = vpop.permute.xlu0 %302
      %304 = vrot.lane.b32.xlu0 %v296, 116
      %v305 = vpop.permute.xlu0 %304
      %306 = vrot.lane.b32.xlu0 %v299, 116
      %v307 = vpop.permute.xlu0 %306
      %s312 = scalar_lea.vmem %s174, 48
      %313 = vst.msk [vmem:[%s312] sm:$0xf] %vm228, %v301
      %314 = vst.msk [vmem:[%s312 + $0x4] sm:$0xf] %vm228, %v303
      %315 = vst.msk [vmem:[%s312 + $0x8] sm:$0xf] %vm228, %v305
      %316 = vst.msk [vmem:[%s312 + $0xc] sm:$0xf] %vm228, %v307
      %v317 = vld [vmem:[%s166] sm:$0xf]
      %v318 = vld [vmem:[%s166 + $0x4] sm:$0xf]
      %v319 = vld [vmem:[%s166 + $0x8] sm:$0xf]
      %v320 = vld [vmem:[%s166 + $0xc] sm:$0xf]
      %325 = vst [vmem:[#allocation1] ss:$2 sm:$0xff] %v317
      %s326 = scalar_lea.vmem [#allocation1], 1
      %327 = vst [vmem:[%s326] ss:$2 sm:$0xff] %v318
      %s328 = scalar_lea.vmem [#allocation1], 16
      %329 = vst [vmem:[%s328] ss:$2 sm:$0xff] %v319
      %s330 = scalar_lea.vmem [#allocation1], 17
      %331 = vst [vmem:[%s330] ss:$2 sm:$0xff] %v320
      %v332 = vld.sshfl [vmem:[#allocation1] sm:$0xff pattern:$0x75316420]
      %v333 = vld.sshfl [vmem:[#allocation1 + $0x10] sm:$0xff pattern:$0x75316420]
      %334 = vrot.lane.b32.xlu0 %v332, 112
      %v335 = vpop.permute.xlu0 %334
      %336 = vrot.lane.b32.xlu0 %v333, 112
      %v337 = vpop.permute.xlu0 %336
      %v338 = vsel %vm194, %v335, 0
      %v340 = vsel %vm194, %v337, 0
      %342 = vmatpush.msra.mxu0 0.0
      %343 = vmatpush.msra.mxu0 0.0
      %344 = vmatpush.msra.mxu0 0.0
      %345 = vmatpush.msra.mxu0 0.0
      %346 = vmatpush.msra.mxu0 0.0
      %347 = vmatpush.msra.mxu0 0.0
      %348 = vmatpush.msra.mxu0 0.0
      %349 = vmatpush.msra.mxu0 0.0
      %350 = vmatpush.msra.mxu0 0.0
      %351 = vmatpush.msra.mxu0 0.0
      %352 = vmatpush.msra.mxu0 0.0
      %353 = vmatpush.msra.mxu0 0.0
      %354 = vmatpush.msra.mxu0 0.0
      %355 = vmatpush.msra.mxu0 0.0
      %356 = vmatpush.msra.mxu0 %v176
      %357 = vmatpush.msra.mxu0 %v175
      %358 = vmatmul.f32.gmra.mxu0 %v338
      %v359 = vpop.f32.mrf.mxu0
      %v360 = vadd.f32 0.0, %v359
      %361 = vmatmul.f32.gmra.mxu0 %v340
      %v362 = vpop.f32.mrf.mxu0
      %v363 = vadd.f32 0.0, %v362
      %364 = vdwg.mxu0
      %v367 = vrot.slane %v360, 4
      %v368 = vrot.slane %v363, 4
      %s371 = scalar_lea.vmem %s174, 64
      %372 = vst.msk [vmem:[%s371] sm:$0xf] %vm228, %v360
      %373 = vst.msk [vmem:[%s371 + $0x4] sm:$0xf] %vm228, %v367
      %374 = vst.msk [vmem:[%s371 + $0x8] sm:$0xf] %vm228, %v363
      %375 = vst.msk [vmem:[%s371 + $0xc] sm:$0xf] %vm228, %v368
      %376 = vst [vmem:[#allocation1] ss:$2 sm:$0xff] %v360
      %v377 = vld.sshfl [vmem:[#allocation1] sm:$0xff pattern:$0x75316420]
      %s378 = scalar_lea.vmem [#allocation1], 16
      %379 = vst [vmem:[%s378] ss:$2 sm:$0xff] %v367
      %v380 = vld.sshfl [vmem:[#allocation1 + $0x10] sm:$0xff pattern:$0x75316420]
      %s381 = scalar_lea.vmem [#allocation1], 32
      %382 = vst [vmem:[%s381] ss:$2 sm:$0xff] %v363
      %v383 = vld.sshfl [vmem:[#allocation1 + $0x20] sm:$0xff pattern:$0x75316420]
      %s384 = scalar_lea.vmem [#allocation1], 48
      %385 = vst [vmem:[%s384] ss:$2 sm:$0xff] %v368
      %v386 = vld.sshfl [vmem:[#allocation1 + $0x30] sm:$0xff pattern:$0x75316420]
      %387 = vrot.lane.b32.xlu0 %v377, 124
      %v388 = vpop.permute.xlu0 %387
      %389 = vrot.lane.b32.xlu0 %v380, 124
      %v390 = vpop.permute.xlu0 %389
      %391 = vrot.lane.b32.xlu0 %v383, 124
      %v392 = vpop.permute.xlu0 %391
      %393 = vrot.lane.b32.xlu0 %v386, 124
      %v394 = vpop.permute.xlu0 %393
      %s399 = scalar_lea.vmem %s174, 80
      %400 = vst.msk [vmem:[%s399] sm:$0xf] %vm228, %v388
      %401 = vst.msk [vmem:[%s399 + $0x4] sm:$0xf] %vm228, %v390
      %402 = vst.msk [vmem:[%s399 + $0x8] sm:$0xf] %vm228, %v392
      %403 = vst.msk [vmem:[%s399 + $0xc] sm:$0xf] %vm228, %v394
      %404 = vst [vmem:[#allocation1] ss:$2 sm:$0xff] %v360
      %v405 = vld.sshfl [vmem:[#allocation1] sm:$0xff pattern:$0x75316420]
      %s406 = scalar_lea.vmem [#allocation1], 16
      %407 = vst [vmem:[%s406] ss:$2 sm:$0xff] %v367
      %v408 = vld.sshfl [vmem:[#allocation1 + $0x10] sm:$0xff pattern:$0x75316420]
      %s409 = scalar_lea.vmem [#allocation1], 32
      %410 = vst [vmem:[%s409] ss:$2 sm:$0xff] %v363
      %v411 = vld.sshfl [vmem:[#allocation1 + $0x20] sm:$0xff pattern:$0x75316420]
      %s412 = scalar_lea.vmem [#allocation1], 48
      %413 = vst [vmem:[%s412] ss:$2 sm:$0xff] %v368
      %v414 = vld.sshfl [vmem:[#allocation1 + $0x30] sm:$0xff pattern:$0x75316420]
      %415 = vrot.lane.b32.xlu0 %v405, 120
      %v416 = vpop.permute.xlu0 %415
      %417 = vrot.lane.b32.xlu0 %v408, 120
      %v418 = vpop.permute.xlu0 %417
      %419 = vrot.lane.b32.xlu0 %v411, 120
      %v420 = vpop.permute.xlu0 %419
      %421 = vrot.lane.b32.xlu0 %v414, 120
      %v422 = vpop.permute.xlu0 %421
      %s427 = scalar_lea.vmem %s174, 96
      %428 = vst.msk [vmem:[%s427] sm:$0xf] %vm228, %v416
      %429 = vst.msk [vmem:[%s427 + $0x4] sm:$0xf] %vm228, %v418
      %430 = vst.msk [vmem:[%s427 + $0x8] sm:$0xf] %vm228, %v420
      %431 = vst.msk [vmem:[%s427 + $0xc] sm:$0xf] %vm228, %v422
      %432 = vst [vmem:[#allocation1] ss:$2 sm:$0xff] %v360
      %v433 = vld.sshfl [vmem:[#allocation1] sm:$0xff pattern:$0x75316420]
      %s434 = scalar_lea.vmem [#allocation1], 16
      %435 = vst [vmem:[%s434] ss:$2 sm:$0xff] %v367
      %v436 = vld.sshfl [vmem:[#allocation1 + $0x10] sm:$0xff pattern:$0x75316420]
      %s437 = scalar_lea.vmem [#allocation1], 32
      %438 = vst [vmem:[%s437] ss:$2 sm:$0xff] %v363
      %v439 = vld.sshfl [vmem:[#allocation1 + $0x20] sm:$0xff pattern:$0x75316420]
      %s440 = scalar_lea.vmem [#allocation1], 48
      %441 = vst [vmem:[%s440] ss:$2 sm:$0xff] %v368
      %v442 = vld.sshfl [vmem:[#allocation1 + $0x30] sm:$0xff pattern:$0x75316420]
      %443 = vrot.lane.b32.xlu0 %v433, 116
      %v444 = vpop.permute.xlu0 %443
      %445 = vrot.lane.b32.xlu0 %v436, 116
      %v446 = vpop.permute.xlu0 %445
      %447 = vrot.lane.b32.xlu0 %v439, 116
      %v448 = vpop.permute.xlu0 %447
      %449 = vrot.lane.b32.xlu0 %v442, 116
      %v450 = vpop.permute.xlu0 %449
      %s455 = scalar_lea.vmem %s174, 112
      %456 = vst.msk [vmem:[%s455] sm:$0xf] %vm228, %v444
      %457 = vst.msk [vmem:[%s455 + $0x4] sm:$0xf] %vm228, %v446
      %458 = vst.msk [vmem:[%s455 + $0x8] sm:$0xf] %vm228, %v448
      %459 = vst.msk [vmem:[%s455 + $0xc] sm:$0xf] %vm228, %v450
      %v460 = vld [vmem:[%s166] sm:$0xf]
      %v461 = vld [vmem:[%s166 + $0x4] sm:$0xf]
      %v462 = vld [vmem:[%s166 + $0x8] sm:$0xf]
      %v463 = vld [vmem:[%s166 + $0xc] sm:$0xf]
      %468 = vst [vmem:[#allocation1] ss:$2 sm:$0xff] %v460
      %s469 = scalar_lea.vmem [#allocation1], 1
      %470 = vst [vmem:[%s469] ss:$2 sm:$0xff] %v461
      %s471 = scalar_lea.vmem [#allocation1], 16
      %472 = vst [vmem:[%s471] ss:$2 sm:$0xff] %v462
      %s473 = scalar_lea.vmem [#allocation1], 17
      %474 = vst [vmem:[%s473] ss:$2 sm:$0xff] %v463
      %v475 = vld.sshfl [vmem:[#allocation1] sm:$0xff pattern:$0x75316420]
      %v476 = vld.sshfl [vmem:[#allocation1 + $0x10] sm:$0xff pattern:$0x75316420]
      %477 = vrot.lane.b32.xlu0 %v475, 96
      %v478 = vpop.permute.xlu0 %477
      %479 = vrot.lane.b32.xlu0 %v476, 96
      %v480 = vpop.permute.xlu0 %479
      %v481 = vsel %vm194, %v478, 0
      %v483 = vsel %vm194, %v480, 0
      %485 = vmatpush.msra.mxu0 0.0
      %486 = vmatpush.msra.mxu0 0.0
      %487 = vmatpush.msra.mxu0 0.0
      %488 = vmatpush.msra.mxu0 0.0
      %489 = vmatpush.msra.mxu0 0.0
      %490 = vmatpush.msra.mxu0 0.0
      %491 = vmatpush.msra.mxu0 0.0
      %492 = vmatpush.msra.mxu0 0.0
      %493 = vmatpush.msra.mxu0 0.0
      %494 = vmatpush.msra.mxu0 0.0
      %495 = vmatpush.msra.mxu0 0.0
      %496 = vmatpush.msra.mxu0 0.0
      %497 = vmatpush.msra.mxu0 0.0
      %498 = vmatpush.msra.mxu0 0.0
      %499 = vmatpush.msra.mxu0 %v176
      %500 = vmatpush.msra.mxu0 %v175
      %501 = vmatmul.f32.gmra.mxu0 %v481
      %v502 = vpop.f32.mrf.mxu0
      %v503 = vadd.f32 0.0, %v502
      %504 = vmatmul.f32.gmra.mxu0 %v483
      %v505 = vpop.f32.mrf.mxu0
      %v506 = vadd.f32 0.0, %v505
      %507 = vdwg.mxu0
      %v510 = vrot.slane %v503, 4
      %v511 = vrot.slane %v506, 4
      %s514 = scalar_lea.vmem %s174, 128
      %515 = vst.msk [vmem:[%s514] sm:$0xf] %vm228, %v503
      %516 = vst.msk [vmem:[%s514 + $0x4] sm:$0xf] %vm228, %v510
      %517 = vst.msk [vmem:[%s514 + $0x8] sm:$0xf] %vm228, %v506
      %518 = vst.msk [vmem:[%s514 + $0xc] sm:$0xf] %vm228, %v511
      %519 = vst [vmem:[#allocation1] ss:$2 sm:$0xff] %v503
      %v520 = vld.sshfl [vmem:[#allocation1] sm:$0xff pattern:$0x75316420]
      %s521 = scalar_lea.vmem [#allocation1], 16
      %522 = vst [vmem:[%s521] ss:$2 sm:$0xff] %v510
      %v523 = vld.sshfl [vmem:[#allocation1 + $0x10] sm:$0xff pattern:$0x75316420]
      %s524 = scalar_lea.vmem [#allocation1], 32
      %525 = vst [vmem:[%s524] ss:$2 sm:$0xff] %v506
      %v526 = vld.sshfl [vmem:[#allocation1 + $0x20] sm:$0xff pattern:$0x75316420]
      %s527 = scalar_lea.vmem [#allocation1], 48
      %528 = vst [vmem:[%s527] ss:$2 sm:$0xff] %v511
      %v529 = vld.sshfl [vmem:[#allocation1 + $0x30] sm:$0xff pattern:$0x75316420]
      %530 = vrot.lane.b32.xlu0 %v520, 124
      %v531 = vpop.permute.xlu0 %530
      %532 = vrot.lane.b32.xlu0 %v523, 124
      %v533 = vpop.permute.xlu0 %532
      %534 = vrot.lane.b32.xlu0 %v526, 124
      %v535 = vpop.permute.xlu0 %534
      %536 = vrot.lane.b32.xlu0 %v529, 124
      %v537 = vpop.permute.xlu0 %536
      %s542 = scalar_lea.vmem %s174, 144
      %543 = vst.msk [vmem:[%s542] sm:$0xf] %vm228, %v531
      %544 = vst.msk [vmem:[%s542 + $0x4] sm:$0xf] %vm228, %v533
      %545 = vst.msk [vmem:[%s542 + $0x8] sm:$0xf] %vm228, %v535
      %546 = vst.msk [vmem:[%s542 + $0xc] sm:$0xf] %vm228, %v537
      %547 = vst [vmem:[#allocation1] ss:$2 sm:$0xff] %v503
      %v548 = vld.sshfl [vmem:[#allocation1] sm:$0xff pattern:$0x75316420]
      %s549 = scalar_lea.vmem [#allocation1], 16
      %550 = vst [vmem:[%s549] ss:$2 sm:$0xff] %v510
      %v551 = vld.sshfl [vmem:[#allocation1 + $0x10] sm:$0xff pattern:$0x75316420]
      %s552 = scalar_lea.vmem [#allocation1], 32
      %553 = vst [vmem:[%s552] ss:$2 sm:$0xff] %v506
      %v554 = vld.sshfl [vmem:[#allocation1 + $0x20] sm:$0xff pattern:$0x75316420]
      %s555 = scalar_lea.vmem [#allocation1], 48
      %556 = vst [vmem:[%s555] ss:$2 sm:$0xff] %v511
      %v557 = vld.sshfl [vmem:[#allocation1 + $0x30] sm:$0xff pattern:$0x75316420]
      %558 = vrot.lane.b32.xlu0 %v548, 120
      %v559 = vpop.permute.xlu0 %558
      %560 = vrot.lane.b32.xlu0 %v551, 120
      %v561 = vpop.permute.xlu0 %560
      %562 = vrot.lane.b32.xlu0 %v554, 120
      %v563 = vpop.permute.xlu0 %562
      %564 = vrot.lane.b32.xlu0 %v557, 120
      %v565 = vpop.permute.xlu0 %564
      %s570 = scalar_lea.vmem %s174, 160
      %571 = vst.msk [vmem:[%s570] sm:$0xf] %vm228, %v559
      %572 = vst.msk [vmem:[%s570 + $0x4] sm:$0xf] %vm228, %v561
      %573 = vst.msk [vmem:[%s570 + $0x8] sm:$0xf] %vm228, %v563
      %574 = vst.msk [vmem:[%s570 + $0xc] sm:$0xf] %vm228, %v565
      %575 = vst [vmem:[#allocation1] ss:$2 sm:$0xff] %v503
      %v576 = vld.sshfl [vmem:[#allocation1] sm:$0xff pattern:$0x75316420]
      %s577 = scalar_lea.vmem [#allocation1], 16
      %578 = vst [vmem:[%s577] ss:$2 sm:$0xff] %v510
      %v579 = vld.sshfl [vmem:[#allocation1 + $0x10] sm:$0xff pattern:$0x75316420]
      %s580 = scalar_lea.vmem [#allocation1], 32
      %581 = vst [vmem:[%s580] ss:$2 sm:$0xff] %v506
      %v582 = vld.sshfl [vmem:[#allocation1 + $0x20] sm:$0xff pattern:$0x75316420]
      %s583 = scalar_lea.vmem [#allocation1], 48
      %584 = vst [vmem:[%s583] ss:$2 sm:$0xff] %v511
      %v585 = vld.sshfl [vmem:[#allocation1 + $0x30] sm:$0xff pattern:$0x75316420]
      %586 = vrot.lane.b32.xlu0 %v576, 116
      %v587 = vpop.permute.xlu0 %586
      %588 = vrot.lane.b32.xlu0 %v579, 116
      %v589 = vpop.permute.xlu0 %588
      %590 = vrot.lane.b32.xlu0 %v582, 116
      %v591 = vpop.permute.xlu0 %590
      %592 = vrot.lane.b32.xlu0 %v585, 116
      %v593 = vpop.permute.xlu0 %592
      %s598 = scalar_lea.vmem %s174, 176
      %599 = vst.msk [vmem:[%s598] sm:$0xf] %vm228, %v587
      %600 = vst.msk [vmem:[%s598 + $0x4] sm:$0xf] %vm228, %v589
      %601 = vst.msk [vmem:[%s598 + $0x8] sm:$0xf] %vm228, %v591
      %602 = vst.msk [vmem:[%s598 + $0xc] sm:$0xf] %vm228, %v593
      %v603 = vld [vmem:[%s166] sm:$0xf]
      %v604 = vld [vmem:[%s166 + $0x4] sm:$0xf]
      %v605 = vld [vmem:[%s166 + $0x8] sm:$0xf]
      %v606 = vld [vmem:[%s166 + $0xc] sm:$0xf]
      %611 = vst [vmem:[#allocation1] ss:$2 sm:$0xff] %v603
      %s612 = scalar_lea.vmem [#allocation1], 1
      %613 = vst [vmem:[%s612] ss:$2 sm:$0xff] %v604
      %s614 = scalar_lea.vmem [#allocation1], 16
      %615 = vst [vmem:[%s614] ss:$2 sm:$0xff] %v605
      %s616 = scalar_lea.vmem [#allocation1], 17
      %617 = vst [vmem:[%s616] ss:$2 sm:$0xff] %v606
      %v618 = vld.sshfl [vmem:[#allocation1] sm:$0xff pattern:$0x75316420]
      %v619 = vld.sshfl [vmem:[#allocation1 + $0x10] sm:$0xff pattern:$0x75316420]
      %620 = vrot.lane.b32.xlu0 %v618, 80
      %v621 = vpop.permute.xlu0 %620
      %622 = vrot.lane.b32.xlu0 %v619, 80
      %v623 = vpop.permute.xlu0 %622
      %v624 = vsel %vm194, %v621, 0
      %v626 = vsel %vm194, %v623, 0
      %628 = vmatpush.msra.mxu0 0.0
      %629 = vmatpush.msra.mxu0 0.0
      %630 = vmatpush.msra.mxu0 0.0
      %631 = vmatpush.msra.mxu0 0.0
      %632 = vmatpush.msra.mxu0 0.0
      %633 = vmatpush.msra.mxu0 0.0
      %634 = vmatpush.msra.mxu0 0.0
      %635 = vmatpush.msra.mxu0 0.0
      %636 = vmatpush.msra.mxu0 0.0
      %637 = vmatpush.msra.mxu0 0.0
      %638 = vmatpush.msra.mxu0 0.0
      %639 = vmatpush.msra.mxu0 0.0
      %640 = vmatpush.msra.mxu0 0.0
      %641 = vmatpush.msra.mxu0 0.0
      %642 = vmatpush.msra.mxu0 %v176
      %643 = vmatpush.msra.mxu0 %v175
      %644 = vmatmul.f32.gmra.mxu0 %v624
      %v645 = vpop.f32.mrf.mxu0
      %v646 = vadd.f32 0.0, %v645
      %647 = vmatmul.f32.gmra.mxu0 %v626
      %v648 = vpop.f32.mrf.mxu0
      %v649 = vadd.f32 0.0, %v648
      %650 = vdwg.mxu0
      %v653 = vrot.slane %v646, 4
      %v654 = vrot.slane %v649, 4
      %s657 = scalar_lea.vmem %s174, 192
      %658 = vst.msk [vmem:[%s657] sm:$0xf] %vm228, %v646
      %659 = vst.msk [vmem:[%s657 + $0x4] sm:$0xf] %vm228, %v653
      %660 = vst.msk [vmem:[%s657 + $0x8] sm:$0xf] %vm228, %v649
      %661 = vst.msk [vmem:[%s657 + $0xc] sm:$0xf] %vm228, %v654
      %662 = vst [vmem:[#allocation1] ss:$2 sm:$0xff] %v646
      %v663 = vld.sshfl [vmem:[#allocation1] sm:$0xff pattern:$0x75316420]
      %s664 = scalar_lea.vmem [#allocation1], 16
      %665 = vst [vmem:[%s664] ss:$2 sm:$0xff] %v653
      %v666 = vld.sshfl [vmem:[#allocation1 + $0x10] sm:$0xff pattern:$0x75316420]
      %s667 = scalar_lea.vmem [#allocation1], 32
      %668 = vst [vmem:[%s667] ss:$2 sm:$0xff] %v649
      %v669 = vld.sshfl [vmem:[#allocation1 + $0x20] sm:$0xff pattern:$0x75316420]
      %s670 = scalar_lea.vmem [#allocation1], 48
      %671 = vst [vmem:[%s670] ss:$2 sm:$0xff] %v654
      %v672 = vld.sshfl [vmem:[#allocation1 + $0x30] sm:$0xff pattern:$0x75316420]
      %673 = vrot.lane.b32.xlu0 %v663, 124
      %v674 = vpop.permute.xlu0 %673
      %675 = vrot.lane.b32.xlu0 %v666, 124
      %v676 = vpop.permute.xlu0 %675
      %677 = vrot.lane.b32.xlu0 %v669, 124
      %v678 = vpop.permute.xlu0 %677
      %679 = vrot.lane.b32.xlu0 %v672, 124
      %v680 = vpop.permute.xlu0 %679
      %s685 = scalar_lea.vmem %s174, 208
      %686 = vst.msk [vmem:[%s685] sm:$0xf] %vm228, %v674
      %687 = vst.msk [vmem:[%s685 + $0x4] sm:$0xf] %vm228, %v676
      %688 = vst.msk [vmem:[%s685 + $0x8] sm:$0xf] %vm228, %v678
      %689 = vst.msk [vmem:[%s685 + $0xc] sm:$0xf] %vm228, %v680
      %690 = vst [vmem:[#allocation1] ss:$2 sm:$0xff] %v646
      %v691 = vld.sshfl [vmem:[#allocation1] sm:$0xff pattern:$0x75316420]
      %s692 = scalar_lea.vmem [#allocation1], 16
      %693 = vst [vmem:[%s692] ss:$2 sm:$0xff] %v653
      %v694 = vld.sshfl [vmem:[#allocation1 + $0x10] sm:$0xff pattern:$0x75316420]
      %s695 = scalar_lea.vmem [#allocation1], 32
      %696 = vst [vmem:[%s695] ss:$2 sm:$0xff] %v649
      %v697 = vld.sshfl [vmem:[#allocation1 + $0x20] sm:$0xff pattern:$0x75316420]
      %s698 = scalar_lea.vmem [#allocation1], 48
      %699 = vst [vmem:[%s698] ss:$2 sm:$0xff] %v654
      %v700 = vld.sshfl [vmem:[#allocation1 + $0x30] sm:$0xff pattern:$0x75316420]
      %701 = vrot.lane.b32.xlu0 %v691, 120
      %v702 = vpop.permute.xlu0 %701
      %703 = vrot.lane.b32.xlu0 %v694, 120
      %v704 = vpop.permute.xlu0 %703
      %705 = vrot.lane.b32.xlu0 %v697, 120
      %v706 = vpop.permute.xlu0 %705
      %707 = vrot.lane.b32.xlu0 %v700, 120
      %v708 = vpop.permute.xlu0 %707
      %s713 = scalar_lea.vmem %s174, 224
      %714 = vst.msk [vmem:[%s713] sm:$0xf] %vm228, %v702
      %715 = vst.msk [vmem:[%s713 + $0x4] sm:$0xf] %vm228, %v704
      %716 = vst.msk [vmem:[%s713 + $0x8] sm:$0xf] %vm228, %v706
      %717 = vst.msk [vmem:[%s713 + $0xc] sm:$0xf] %vm228, %v708
      %718 = vst [vmem:[#allocation1] ss:$2 sm:$0xff] %v646
      %v719 = vld.sshfl [vmem:[#allocation1] sm:$0xff pattern:$0x75316420]
      %s720 = scalar_lea.vmem [#allocation1], 16
      %721 = vst [vmem:[%s720] ss:$2 sm:$0xff] %v653
      %v722 = vld.sshfl [vmem:[#allocation1 + $0x10] sm:$0xff pattern:$0x75316420]
      %s723 = scalar_lea.vmem [#allocation1], 32
      %724 = vst [vmem:[%s723] ss:$2 sm:$0xff] %v649
      %v725 = vld.sshfl [vmem:[#allocation1 + $0x20] sm:$0xff pattern:$0x75316420]
      %s726 = scalar_lea.vmem [#allocation1], 48
      %727 = vst [vmem:[%s726] ss:$2 sm:$0xff] %v654
      %v728 = vld.sshfl [vmem:[#allocation1 + $0x30] sm:$0xff pattern:$0x75316420]
      %729 = vrot.lane.b32.xlu0 %v719, 116
      %v730 = vpop.permute.xlu0 %729
      %731 = vrot.lane.b32.xlu0 %v722, 116
      %v732 = vpop.permute.xlu0 %731
      %733 = vrot.lane.b32.xlu0 %v725, 116
      %v734 = vpop.permute.xlu0 %733
      %735 = vrot.lane.b32.xlu0 %v728, 116
      %v736 = vpop.permute.xlu0 %735
      %s741 = scalar_lea.vmem %s174, 240
      %742 = vst.msk [vmem:[%s741] sm:$0xf] %vm228, %v730
      %743 = vst.msk [vmem:[%s741 + $0x4] sm:$0xf] %vm228, %v732
      %744 = vst.msk [vmem:[%s741 + $0x8] sm:$0xf] %vm228, %v734
      %745 = vst.msk [vmem:[%s741 + $0xc] sm:$0xf] %vm228, %v736
      %p746 = scmp.lt.s32.totalorder %s17, 1
      %s747 = scalar_select %p746, %s17, 1
      %p748 = scmp.lt.s32.totalorder %s18, 0
      %s749 = scalar_select %p748, %s18, 0
      %s750 = smul.addr %s747, 64
      %s751 = sadd.s32 %s749, %s750
      %s752 = smul.addr %s751, 4
      %s753 = scalar_lea.vmem %s2, %s752
      // Predicated region
      $region29: #{space_to_depth.1} parent=27 // pred_check
        %p754 = pneg %p94
      $region30: #{space_to_depth.1} parent=27 // pred_check_branch
        %756 = sbr.rel (%p754) target = $region32
      $region31: #{space_to_depth.1} parent=27 // pred_region
        _
      $region32: #{space_to_depth.1} parent=27 // pred_fallthru
        _
    $region28: #{space_to_depth.1} parent=5 // pred_fallthru
      _
    %p757 = scmp.le.s32.totalorder 2, %s8
    // Predicated region
    $region33: #{space_to_depth.1} parent=5 // pred_check
      %p758 = pneg %p757
    $region34: #{space_to_depth.1} parent=5 // pred_check_branch
      %760 = sbr.rel (%p758) target = $region36
    $region35: #{space_to_depth.1} parent=5 // pred_region
      %s761 = ssub.s32 %s8, 2
      // Predicated region
      $region37: #{space_to_depth.1} parent=35 // pred_check
        %p762 = pneg %p100
      $region38: #{space_to_depth.1} parent=35 // pred_check_branch
        %764 = sbr.rel (%p762) target = $region40
      $region39: #{space_to_depth.1} parent=35 // pred_region
        %p765 = scmp.lt.s32.totalorder %s19, 1
        %s766 = scalar_select %p765, %s19, 1
        %p767 = scmp.lt.s32.totalorder %s20, 0
        %s768 = scalar_select %p767, %s20, 0
        %s769 = smul.addr %s766, 64
        %s770 = sadd.s32 %s768, %s769
        %s771 = smul.addr %s770, 4
        %s772 = scalar_lea.vmem %s2, %s771
      $region40: #{space_to_depth.1} parent=35 // pred_fallthru
        _
    $region36: #{space_to_depth.1} parent=5 // pred_fallthru
      _
  $region6: #{space_to_depth.1} parent=0 // loop_footer
    %s12 = sadd.s32 1, %s8
  $region7: #{space_to_depth.1} parent=0 // loop_footer_branch
    %7 = sbr.rel target = $region3
  $region8: #{space_to_depth.1} parent=0 // loop_exit
    _

</llo_original>
